<compile_context>
chip_gen: v5e
topology: v5e:2x2
jax: 0.10.0
libtpu: 0.0.40
codegen_flags: <defaults>
</compile_context>

<pallas_src>
import functools

import jax
import jax.numpy as jnp
from jax.experimental import pallas as pl
from jax.experimental.pallas import tpu as pltpu

MARGIN = 1.0
EPS = 1e-9


def _contrastive_kernel(o1_ref, o2_ref, t_ref, loss_ref, *, margin, eps):
    # Upcast after load; all math in f32 (fast path on every generation).
    x1 = o1_ref[...].astype(jnp.float32)                  # (TB, D)
    x2 = o2_ref[...].astype(jnp.float32)                  # (TB, D)
    diff = x2 - x1
    dist = jnp.sum(diff * diff, axis=1, keepdims=True)    # (TB, 1)
    t = t_ref[...]                                        # (TB, 1) f32, read once
    hinge = jnp.maximum(margin - jnp.sqrt(dist + eps), 0.0)
    loss_ref[...] = 0.5 * (t * dist + (1.0 - t) * hinge * hinge)


def _choose_block_rows(batch, d, itemsize):
    # ~2 MiB per input block => 2 inputs x 2 pipeline buffers ~= 8 MiB VMEM.
    target_block_bytes = 2 * 1024 * 1024
    tb = target_block_bytes // max(1, d * itemsize)
    tb = max(8, min(1024, int(tb)))
    tb = (tb // 8) * 8                                    # sublane multiple of 8
    if tb >= batch:
        return batch                                      # single full-array tile
    return tb


def contrastive_loss(output1, output2, target, margin=MARGIN, size_average=True,
                     block_rows=None):
    """output1/output2: (B, D) float (f32 / bf16 / ...); target: (B,), 1 = same class."""
    B, D = output1.shape
    assert output2.shape == (B, D)

    itemsize = jnp.dtype(output1.dtype).itemsize
    if block_rows is not None:
        tb = int(block_rows)
        tb = B if tb >= B else max(8, (tb // 8) * 8)      # keep block legal
    else:
        tb = _choose_block_rows(B, D, itemsize)
    num_tiles = pl.cdiv(B, tb)

    t2d = target.astype(jnp.float32).reshape(B, 1)

    kernel = functools.partial(_contrastive_kernel, margin=float(margin), eps=float(EPS))

    cost = pl.CostEstimate(
        flops=3 * B * D + 8 * B,                    # sub, square, reduce + per-row epilogue
        transcendentals=B,                          # one sqrt per row
        bytes_accessed=2 * B * D * itemsize + B * 4 + B * 4,
    )

    losses = pl.pallas_call(
        kernel,
        out_shape=jax.ShapeDtypeStruct((B, 1), jnp.float32),
        grid=(num_tiles,),
        in_specs=[
            pl.BlockSpec((tb, D), lambda i: (i, 0)),
            pl.BlockSpec((tb, D), lambda i: (i, 0)),
            pl.BlockSpec((tb, 1), lambda i: (i, 0)),
        ],
        out_specs=pl.BlockSpec((tb, 1), lambda i: (i, 0)),
        compiler_params=pltpu.CompilerParams(dimension_semantics=("parallel",)),
        cost_estimate=cost,
    )(output1, output2, t2d)

    per_row = losses[:, 0]                          # exactly B valid rows
    total = jnp.sum(per_row)
    return total / B if size_average else total     # divide by true B exactly once


def _reference(output1, output2, target, margin=MARGIN, size_average=True):
    o1 = output1.astype(jnp.float32)
    o2 = output2.astype(jnp.float32)
    distances = jnp.sum((o2 - o1) ** 2, axis=1)
    hinge = jnp.maximum(margin - jnp.sqrt(distances + EPS), 0.0)
    t = target.astype(jnp.float32)
    losses = 0.5 * (t * distances + (1.0 - t) * hinge * hinge)
    return jnp.mean(losses) if size_average else jnp.sum(losses)


if __name__ == "__main__":
    key = jax.random.PRNGKey(0)
    k1, k2, k3 = jax.random.split(key, 3)

    # Test 1: small f32, mean reduction (single full-array tile).
    B, D = 8, 32
    output1 = jax.random.normal(k1, (B, D), dtype=jnp.float32)
    output2 = jax.random.normal(k2, (B, D), dtype=jnp.float32)
    target = jax.random.bernoulli(k3, 0.5, (B,)).astype(jnp.int32)

    loss = jax.block_until_ready(
        contrastive_loss(output1, output2, target, margin=MARGIN, size_average=True))
    ref = _reference(output1, output2, target, MARGIN, True)
    assert jnp.allclose(loss, ref, rtol=1e-5, atol=1e-6), (loss, ref)

    # Test 2: bf16 inputs, ragged batch (B=10, TB=8 -> 2 tiles, partial last
    # tile), sum reduction.  Kernel upcasts in-kernel.
    B2, D2 = 10, 32
    o1b = jax.random.normal(k1, (B2, D2), dtype=jnp.bfloat16)
    o2b = jax.random.normal(k2, (B2, D2), dtype=jnp.bfloat16)
    tgt2 = jax.random.bernoulli(k3, 0.5, (B2,)).astype(jnp.int32)

    loss2 = jax.block_until_ready(
        contrastive_loss(o1b, o2b, tgt2, margin=MARGIN, size_average=False, block_rows=8))
    ref2 = _reference(o1b, o2b, tgt2, MARGIN, False)
    assert jnp.allclose(loss2, ref2, rtol=1e-4, atol=1e-4), (loss2, ref2)

    # Test 3: f32, D not a multiple of 128, multi-tile with partial last tile,
    # mean reduction, non-default margin.
    B3, D3 = 20, 96
    o1c = jax.random.normal(k1, (B3, D3), dtype=jnp.float32)
    o2c = jax.random.normal(k2, (B3, D3), dtype=jnp.float32)
    tgt3 = jax.random.bernoulli(k3, 0.5, (B3,)).astype(jnp.int32)

    loss3 = jax.block_until_ready(
        contrastive_loss(o1c, o2c, tgt3, margin=2.0, size_average=True, block_rows=8))
    ref3 = _reference(o1c, o2c, tgt3, 2.0, True)
    assert jnp.allclose(loss3, ref3, rtol=1e-5, atol=1e-6), (loss3, ref3)

    print("KERNEL_OK")
</pallas_src>

<mosaic_0001>
module attributes {stable_mosaic.version = 11 : i64} {
  func.func @_contrastive_kernel(%arg0: i32, %arg1: memref<8x32xf32, #tpu.memory_space<vmem>>, %arg2: memref<8x32xf32, #tpu.memory_space<vmem>>, %arg3: memref<8x1xf32, #tpu.memory_space<vmem>>, %arg4: memref<8x1xf32, #tpu.memory_space<vmem>>) attributes {dimension_semantics = [#tpu.dimension_semantics<parallel>], iteration_bounds = array<i64: 1>, scalar_prefetch = 0 : i64, scratch_operands = 0 : i64, tpu.core_type = #tpu.core_type<tc>, window_params = [{transform_indices = @transform_0, window_bounds = array<i64: 8, 32>}, {transform_indices = @transform_1, window_bounds = array<i64: 8, 32>}, {transform_indices = @transform_2, window_bounds = array<i64: 8, 1>}, {transform_indices = @transform_3, window_bounds = array<i64: 8, 1>}]} {
    %c0 = arith.constant 0 : index
    %c0_0 = arith.constant 0 : index
    %0 = vector.load %arg1[%c0, %c0_0] : memref<8x32xf32, #tpu.memory_space<vmem>>, vector<8x32xf32>
    %c0_1 = arith.constant 0 : index
    %c0_2 = arith.constant 0 : index
    %1 = vector.load %arg2[%c0_1, %c0_2] : memref<8x32xf32, #tpu.memory_space<vmem>>, vector<8x32xf32>
    %2 = arith.subf %1, %0 : vector<8x32xf32>
    %3 = arith.mulf %2, %2 : vector<8x32xf32>
    %cst = arith.constant dense<0.000000e+00> : vector<8xf32>
    %4 = vector.multi_reduction <add>, %3, %cst [1] : vector<8x32xf32> to vector<8xf32>
    %5 = vector.shape_cast %4 : vector<8xf32> to vector<8x1xf32>
    %c0_3 = arith.constant 0 : index
    %c0_4 = arith.constant 0 : index
    %6 = vector.load %arg3[%c0_3, %c0_4] : memref<8x1xf32, #tpu.memory_space<vmem>>, vector<8x1xf32>
    %cst_5 = arith.constant 9.99999971E-10 : f32
    %7 = vector.broadcast %cst_5 : f32 to vector<8x1xf32>
    %8 = arith.addf %5, %7 : vector<8x1xf32>
    %9 = math.sqrt %8 : vector<8x1xf32>
    %cst_6 = arith.constant 1.000000e+00 : f32
    %10 = vector.broadcast %cst_6 : f32 to vector<8x1xf32>
    %11 = arith.subf %10, %9 : vector<8x1xf32>
    %cst_7 = arith.constant 0.000000e+00 : f32
    %12 = vector.broadcast %cst_7 : f32 to vector<8x1xf32>
    %13 = arith.maximumf %11, %12 : vector<8x1xf32>
    %14 = arith.mulf %6, %5 : vector<8x1xf32>
    %cst_8 = arith.constant 1.000000e+00 : f32
    %15 = vector.broadcast %cst_8 : f32 to vector<8x1xf32>
    %16 = arith.subf %15, %6 : vector<8x1xf32>
    %17 = arith.mulf %16, %13 : vector<8x1xf32>
    %18 = arith.mulf %17, %13 : vector<8x1xf32>
    %19 = arith.addf %14, %18 : vector<8x1xf32>
    %cst_9 = arith.constant 5.000000e-01 : f32
    %20 = vector.broadcast %cst_9 : f32 to vector<8x1xf32>
    %21 = arith.mulf %20, %19 : vector<8x1xf32>
    %c0_10 = arith.constant 0 : index
    %c0_11 = arith.constant 0 : index
    %22 = vector.load %arg4[%c0_10, %c0_11] : memref<8x1xf32, #tpu.memory_space<vmem>>, vector<8x1xf32>
    tpu.vector_store %arg4[%c0_10, %c0_11], %21 {strides = array<i32>} : memref<8x1xf32, #tpu.memory_space<vmem>>, vector<8x1xf32>,
    return
  }
  func.func @transform_0(%arg0: i32) -> (i32, i32) {
    %c0_i32 = arith.constant 0 : i32
    %c0_i32_0 = arith.constant 0 : i32
    return %arg0, %c0_i32 : i32, i32
  }
  func.func @transform_1(%arg0: i32) -> (i32, i32) {
    %c0_i32 = arith.constant 0 : i32
    %c0_i32_0 = arith.constant 0 : i32
    return %arg0, %c0_i32 : i32, i32
  }
  func.func @transform_2(%arg0: i32) -> (i32, i32) {
    %c0_i32 = arith.constant 0 : i32
    %c0_i32_0 = arith.constant 0 : i32
    return %arg0, %c0_i32 : i32, i32
  }
  func.func @transform_3(%arg0: i32) -> (i32, i32) {
    %c0_i32 = arith.constant 0 : i32
    %c0_i32_0 = arith.constant 0 : i32
    return %arg0, %c0_i32 : i32, i32
  }
}

</mosaic_0001>

<llo_original>
// kernel: tpu_custom_call.1
$region0: #{tpu_custom_call.1}
  #allocation0 [shape = 'u32[]', space=smem, size = 0x4, offset = 0x4, fixed_abs, tag = 'smem constant byte address 0x4 - core index']
  #allocation1 [shape = 'u32[72,128]{1,0:T(1,128)}', space=vmem, size = 0x9000, scoped, tag = 'internal scratch']
  %s0 = inlined_call_operand.vmem [shape: f32[8,32], index: 0, kind: input, shape index: {}]
  %s1 = inlined_call_operand.hbm [shape: f32[8,32], index: 1, kind: input, shape index: {}]
  %s2 = inlined_call_operand.vmem [shape: f32[8,1], index: 2, kind: input, shape index: {}]
  %s3 = inlined_call_operand.vmem [shape: f32[8,1], index: 3, kind: output, shape index: {}]
  %s4 = sld [smem:[#allocation0]]
  $region26: #{tpu_custom_call.1} parent=0
    _
  %s6 = ssub.s32 1, %s4
  %s7 = scalar_select 0, %s6, %s4
  $region1: #{tpu_custom_call.1} parent=0
    #allocation2 [shape = 'u8[4096]{0}', space=vmem, size = 0x1000, scoped, tag = 'input window, operand 1, single buffered']
    #allocation3 [shape = 's32[1]{0}', space=sflag, size = 0x4, scoped, tag = 'scoped memory for tpu_custom_call.1']
    %8 = vsyncpa [#allocation3], 0
    // Predicated region
    $region2: #{tpu_custom_call.1} parent=1 // pred_check
      _
    $region3: #{tpu_custom_call.1} parent=1 // pred_check_branch
      %10 = sbr.rel (0) target = $region5
    $region4: #{tpu_custom_call.1} parent=1 // pred_region
      _
    $region5: #{tpu_custom_call.1} parent=1 // pred_fallthru
      _
    // Predicated region
    $region6: #{tpu_custom_call.1} parent=1 // pred_check
      _
    $region7: #{tpu_custom_call.1} parent=1 // pred_check_branch
      %12 = sbr.rel (0) target = $region9
    $region8: #{tpu_custom_call.1} parent=1 // pred_region
      %14 = vsyncadd [#allocation3], 0
      %s16 = sshll.u32 %s1, 4
      %s17 = int_to_ptr.hbm [resolvable:$true] %s16
      %s18 = sshll.u32 [#allocation2], 4
      %s19 = int_to_ptr.vmem [resolvable:$true] %s18
      %21 = dma.hbm_to_vmem [thread:$0]  %s17, 128, %s19, [#allocation3]
    $region9: #{tpu_custom_call.1} parent=1 // pred_fallthru
      _
    // Predicated region
    $region10: #{tpu_custom_call.1} parent=1 // pred_check
      _
    $region11: #{tpu_custom_call.1} parent=1 // pred_check_branch
      %23 = sbr.rel (0) target = $region13
    $region12: #{tpu_custom_call.1} parent=1 // pred_region
      _
    $region13: #{tpu_custom_call.1} parent=1 // pred_fallthru
      _
    // Predicated region
    $region14: #{tpu_custom_call.1} parent=1 // pred_check
      _
    $region15: #{tpu_custom_call.1} parent=1 // pred_check_branch
      %25 = sbr.rel (0) target = $region17
    $region16: #{tpu_custom_call.1} parent=1 // pred_region
      %27 = dma.done [#allocation3], 128
    $region17: #{tpu_custom_call.1} parent=1 // pred_fallthru
      _
    %v28 = vld [vmem:[%s0] sm:$0xff]
    %v29 = vld [vmem:[#allocation2] sm:$0xff]
    %v30 = vsub.f32 %v29, %v28
    %v31 = vmul.f32 %v30, %v30
    %vm32 = vcmask 261120
    %v33 = vsel %vm32, %v31, 0.0
    %34 = vadd.xlane.f32.xlu0 %v33
    %v35 = vpop.xlane.xlu0 %34
    %v36 = vld [vmem:[%s2] sm:$0xff]
    %v37 = vadd.f32 %v35, 1e-09
    %v38 = vrsqrt.pop %v37
    %v39 = vmul.f32 %v38, %v37
    %v40 = vmul.f32 %v39, %v38
    %v41 = vmul.f32 0.5, %v40
    %v42 = vsub.f32 1.5, %v41
    %v43 = vmul.f32 %v38, %v42
    %v44 = vmul.f32 %v37, %v43
    %vm45 = vcmp.eq.f32.partialorder %v37, inf
    %v46 = vsel %vm45, %v37, %v44
    %vm47 = vcmp.eq.f32.partialorder %v37, 0.0
    %v48 = vand.u32 %v37, 2147483648
    %v49 = vsel %vm47, %v48, %v46
    %v50 = vsub.f32 1.0, %v49
    %v51 = vmax.f32 %v50, 0.0
    %v52 = vmul.f32 %v36, %v35
    %v53 = vsub.f32 1.0, %v36
    %v54 = vmul.f32 %v53, %v51
    %v55 = vmul.f32 %v54, %v51
    %v56 = vadd.f32 %v52, %v55
    %v57 = vmul.f32 %v56, 0.5
    %vm58 = vcmask 7168
    %59 = vst.msk [vmem:[%s3] sm:$0xff] %vm58, %v57
    // Predicated region
    $region18: #{tpu_custom_call.1} parent=1 // pred_check
      _
    $region19: #{tpu_custom_call.1} parent=1 // pred_check_branch
      %61 = sbr.rel (0) target = $region21
    $region20: #{tpu_custom_call.1} parent=1 // pred_region
      _
    $region21: #{tpu_custom_call.1} parent=1 // pred_fallthru
      _
    // Predicated region
    $region22: #{tpu_custom_call.1} parent=1 // pred_check
      _
    $region23: #{tpu_custom_call.1} parent=1 // pred_check_branch
      %63 = sbr.rel (0) target = $region25
    $region24: #{tpu_custom_call.1} parent=1 // pred_region
      _
    $region25: #{tpu_custom_call.1} parent=1 // pred_fallthru
      _
    %64 = vsyncpa [#allocation3], 1

</llo_original>
